<compile_context>
chip_gen: v7x
topology: tpu7x:2x2x1
jax: 0.10.0
libtpu: 0.0.40
codegen_flags: <defaults>
</compile_context>

<pallas_src>
import jax
import jax.numpy as jnp
from jax.experimental import pallas as pl
from jax.experimental.pallas import tpu as pltpu

_LANE = 128
_TARGET_BLOCK_BYTES = 2 * 1024 * 1024        # per-buffer tile target (~2 MiB)
_MAX_MIN_BLOCK_BYTES = 4 * 1024 * 1024       # bail out if even an 8-row block is huge


def _relu_kernel(x_ref, o_ref):
    x = x_ref[...]
    # dtype-matched zero: no weak-type promotion for integer inputs.
    o_ref[...] = jnp.maximum(x, jnp.zeros((), dtype=x.dtype))


def _num_tensorcores() -> int:
    """Best-effort TensorCores-per-device (grid 'parallel' sharding targets).

    Only affects a perf heuristic (whether to force >=2 grid steps), never
    correctness, so default to 1 (no artificial split) on any failure.
    """
    try:
        kind = jax.devices()[0].device_kind.lower()
    except Exception:  # pragma: no cover - e.g. interpret mode oddities
        return 1
    if any(tag in kind for tag in ("v3", "v4", "v5p", "v7", "tpu7", "7x")):
        return 2
    return 1


def _to_2d(shape, n):
    """(rows, cols) view of the contiguous buffer; reshape is a bitcast."""
    if n % _LANE == 0:
        return n // _LANE, _LANE
    cols = 1
    for d in reversed(shape):
        cols *= int(d)
        if cols >= _LANE:
            break
    return n // cols, cols


def _choose_tile_rows(rows, padded_row_bytes, sub, num_tc):
    """Row-tile: multiple of `sub` (or full extent), ~_TARGET_BLOCK_BYTES per
    buffer, and split >= num_tc ways only on dual-TensorCore parts."""
    target = max(sub, (_TARGET_BLOCK_BYTES // padded_row_bytes) // sub * sub)
    if num_tc > 1 and rows > sub:
        per_core = -(-rows // num_tc)                 # cdiv(rows, num_tc)
        per_core = -(-per_core // sub) * sub          # round up to multiple of sub
        target = min(target, max(sub, per_core))
    if target >= rows:
        return rows                                   # single full-extent block
    return target                                     # ragged last block is masked


@jax.jit
def relu_pallas(x: jax.Array) -> jax.Array:
    """Elementwise ReLU, semantics of torch.nn.ReLU (same shape/dtype)."""
    orig_shape = x.shape
    dtype = x.dtype
    itemsize = dtype.itemsize
    # 8 sublanes for 32-bit, 16 for 16-bit, 32 for 8-bit (packing-friendly).
    sub = max(8, 32 // itemsize)

    n = x.size
    if n == 0:
        return x

    rows, cols = _to_2d(orig_shape, n)
    padded_cols = -(-cols // _LANE) * _LANE           # VMEM lane padding
    padded_row_bytes = padded_cols * itemsize

    if padded_row_bytes * sub > _MAX_MIN_BLOCK_BYTES:
        # Pathological "one huge trailing dim" layout: even the minimum legal
        # block would not fit comfortably in VMEM.  Fused XLA elementwise is
        # already at the HBM roofline, so don't fight it.
        return jnp.maximum(x, jnp.zeros((), dtype=dtype))

    num_tc = _num_tensorcores()
    tile_rows = _choose_tile_rows(rows, padded_row_bytes, sub, num_tc)
    grid = (pl.cdiv(rows, tile_rows),)

    slab = x.reshape(rows, cols)                      # dim-collapse: no copy
    out = pl.pallas_call(
        _relu_kernel,
        out_shape=jax.ShapeDtypeStruct((rows, cols), dtype),
        grid=grid,
        in_specs=[pl.BlockSpec((tile_rows, cols), lambda i: (i, 0))],
        out_specs=pl.BlockSpec((tile_rows, cols), lambda i: (i, 0)),
        compiler_params=pltpu.CompilerParams(
            dimension_semantics=("parallel",)
        ),
    )(slab)
    return out.reshape(orig_shape)


if __name__ == "__main__":
    key = jax.random.PRNGKey(0)
    k1, k2 = jax.random.split(key)

    # Small NCHW input consistent with the module's forward (128-aligned path:
    # n = 2048 -> lane-dense (16, 128) slab).
    x_small = jax.random.normal(k1, (2, 4, 16, 16), dtype=jnp.float32)
    ref_small = jnp.maximum(x_small, 0.0)
    y_small = relu_pallas(x_small)
    jax.block_until_ready(y_small)
    assert y_small.shape == x_small.shape and y_small.dtype == x_small.dtype
    assert jnp.allclose(y_small, ref_small), "mismatch (aligned path)"

    # Small ragged NCHW input (n % 128 != 0), same trailing 14x14 spatial as
    # the original 1x1232x14x14 module shape: exercises the no-pad
    # trailing-collapse path ((8, 196) slab, full-extent lane dim).
    x_ragged = jax.random.normal(k2, (1, 8, 14, 14), dtype=jnp.float32)
    ref_ragged = jnp.maximum(x_ragged, 0.0)
    y_ragged = relu_pallas(x_ragged)
    jax.block_until_ready(y_ragged)
    assert y_ragged.shape == x_ragged.shape and y_ragged.dtype == x_ragged.dtype
    assert jnp.allclose(y_ragged, ref_ragged), "mismatch (ragged path)"

    print("KERNEL_OK")
</pallas_src>

<mosaic_0001>
module attributes {stable_mosaic.version = 11 : i64} {
  func.func @_relu_kernel(%arg0: i32, %arg1: memref<16x128xf32, #tpu.memory_space<vmem>>, %arg2: memref<16x128xf32, #tpu.memory_space<vmem>>) attributes {dimension_semantics = [#tpu.dimension_semantics<parallel>], iteration_bounds = array<i64: 1>, scalar_prefetch = 0 : i64, scratch_operands = 0 : i64, tpu.core_type = #tpu.core_type<tc>, window_params = [{transform_indices = @transform_0, window_bounds = array<i64: 16, 128>}, {transform_indices = @transform_1, window_bounds = array<i64: 16, 128>}]} {
    %c0 = arith.constant 0 : index
    %c0_0 = arith.constant 0 : index
    %0 = vector.load %arg1[%c0, %c0_0] : memref<16x128xf32, #tpu.memory_space<vmem>>, vector<16x128xf32>
    %cst = arith.constant 0.000000e+00 : f32
    %1 = vector.broadcast %cst : f32 to vector<16x128xf32>
    %2 = arith.maximumf %0, %1 : vector<16x128xf32>
    %c0_1 = arith.constant 0 : index
    %c0_2 = arith.constant 0 : index
    %3 = vector.load %arg2[%c0_1, %c0_2] : memref<16x128xf32, #tpu.memory_space<vmem>>, vector<16x128xf32>
    tpu.vector_store %arg2[%c0_1, %c0_2], %2 {strides = array<i32>} : memref<16x128xf32, #tpu.memory_space<vmem>>, vector<16x128xf32>,
    return
  }
  func.func @transform_0(%arg0: i32) -> (i32, i32) {
    %c0_i32 = arith.constant 0 : i32
    %c0_i32_0 = arith.constant 0 : i32
    return %arg0, %c0_i32 : i32, i32
  }
  func.func @transform_1(%arg0: i32) -> (i32, i32) {
    %c0_i32 = arith.constant 0 : i32
    %c0_i32_0 = arith.constant 0 : i32
    return %arg0, %c0_i32 : i32, i32
  }
}

</mosaic_0001>

<llo_original>
// kernel: relu_pallas.1
$region0: #{relu_pallas.1}
  #allocation0 [shape = 'u32[]', space=smem, size = 0x4, offset = 0x4, fixed_abs, tag = 'smem constant byte address 0x4 - core index']
  #allocation1 [shape = 'u32[144,128]{1,0:T(1,128)}', space=vmem, size = 0x12000, scoped, tag = 'internal scratch']
  %s0 = inlined_call_operand.vmem [shape: f32[16,128], index: 0, kind: input, shape index: {}]
  %s1 = inlined_call_operand.vmem [shape: f32[16,128], index: 1, kind: output, shape index: {}]
  %s2 = sld [smem:[#allocation0]]
  $region14: #{relu_pallas.1} parent=0
    _
  %s4 = ssub.s32 1, %s2
  %s5 = scalar_select 0, %s4, %s2
  // Predicated region
  $region2: #{relu_pallas.1} parent=0 // pred_check
    _
  $region3: #{relu_pallas.1} parent=0 // pred_check_branch
    %7 = sbr.rel (0) target = $region5
  $region4: #{relu_pallas.1} parent=0 // pred_region
    _
  $region5: #{relu_pallas.1} parent=0 // pred_fallthru
    _
  %v8 = vld [vmem:[%s0] sm:$0xff]
  %v9 = vld [vmem:[%s0 + $0x8] sm:$0xff]
  %v10 = vmax.f32 %v8, 0.0
  %v11 = vmax.f32 %v9, 0.0
  %12 = vst [vmem:[%s1] sm:$0xff] %v10
  %13 = vst [vmem:[%s1 + $0x8] sm:$0xff] %v11
  // Predicated region
  $region6: #{relu_pallas.1} parent=0 // pred_check
    _
  $region7: #{relu_pallas.1} parent=0 // pred_check_branch
    %15 = sbr.rel (0) target = $region9
  $region8: #{relu_pallas.1} parent=0 // pred_region
    _
  $region9: #{relu_pallas.1} parent=0 // pred_fallthru
    _
  // Predicated region
  $region10: #{relu_pallas.1} parent=0 // pred_check
    _
  $region11: #{relu_pallas.1} parent=0 // pred_check_branch
    %17 = sbr.rel (0) target = $region13
  $region12: #{relu_pallas.1} parent=0 // pred_region
    _
  $region13: #{relu_pallas.1} parent=0 // pred_fallthru
    _

</llo_original>
